<compile_context>
chip_gen: v7x
topology: tpu7x:2x2x1
jax: 0.10.0
libtpu: 0.0.40
codegen_flags: <defaults>
</compile_context>

<pallas_src>
import functools

import jax
import jax.numpy as jnp
from jax.experimental import pallas as pl
from jax.experimental.pallas import tpu as pltpu


def _linear_ln_relu_kernel(x_ref, w_ref, b_ref, g_ref, beta_ref, o_ref, *, eps):
    # x_ref: (rows, idim) [bf16 or f32], w_ref: (idim, odim) [bf16 or f32]
    # b/g/beta: (1, odim) f32, o_ref: (rows, odim)
    y = jnp.dot(x_ref[...], w_ref[...], preferred_element_type=jnp.float32)
    y = y + b_ref[...]                                   # bias, broadcast over rows

    # LayerNorm over the last dim (odim), all in f32.
    mean = jnp.mean(y, axis=-1, keepdims=True)
    diff = y - mean
    var = jnp.mean(diff * diff, axis=-1, keepdims=True)
    y = diff * jax.lax.rsqrt(var + eps)
    y = y * g_ref[...] + beta_ref[...]

    # Dropout(p=0) is identity; ReLU.
    o_ref[...] = jnp.maximum(y, 0.0).astype(o_ref.dtype)


def _round_up(x, m):
    return ((x + m - 1) // m) * m


def _vmem_bytes_estimate(rows, idim, odim, in_bytes, out_bytes):
    x_buf = 2 * rows * idim * in_bytes                 # double-buffered input rows
    o_buf = 2 * rows * _round_up(odim, 128) * out_bytes  # double-buffered output rows
    w_buf = 2 * idim * _round_up(odim, 128) * in_bytes   # weight (worst case 2 bufs)
    vec_buf = 2 * 3 * _round_up(odim, 128) * 4           # bias / gamma / beta
    interm = rows * (3 * _round_up(odim, 128) + idim) * 4  # f32 temporaries
    return x_buf + o_buf + w_buf + vec_buf + interm


def _pick_row_tile(n_rows, idim, odim, in_bytes, out_bytes,
                   cap=512, budget=20 * 1024 * 1024):
    """Largest multiple-of-8 row tile <= cap that fits the VMEM budget."""
    tile = max(8, min(_round_up(cap, 8), _round_up(n_rows, 8)))
    while tile > 8 and _vmem_bytes_estimate(tile, idim, odim,
                                            in_bytes, out_bytes) > budget:
        tile = max(8, _round_up(tile // 2, 8))
    return tile


def linear_layer_forward(src_tokens, src_lengths, weight, bias, gamma, beta,
                         *, eps=1e-5, row_tile=None, mxu_dtype=jnp.bfloat16):
    """Eval-mode SpeechT5 LinearLayer forward.

    src_tokens: [B, T, idim]; weight: [idim, odim]; returns ([T, B, odim], src_lengths).
    """
    B, T, idim = src_tokens.shape
    odim = weight.shape[1]
    out_dtype = src_tokens.dtype

    # MXU operands in bf16 (halves x/weight DMA bytes, doubles MXU rate on
    # v6e/v7x); accumulation and all LayerNorm math stay f32 in the kernel.
    x = src_tokens.astype(mxu_dtype)
    w = weight.astype(mxu_dtype)
    b2d = bias.reshape(1, odim).astype(jnp.float32)
    g2d = gamma.reshape(1, odim).astype(jnp.float32)
    beta2d = beta.reshape(1, odim).astype(jnp.float32)

    in_bytes = jnp.dtype(mxu_dtype).itemsize
    out_bytes = jnp.dtype(out_dtype).itemsize

    kernel = functools.partial(_linear_ln_relu_kernel, eps=eps)

    # Time-major path (no output transpose) needs a lane-aligned odim block.
    time_major_ok = (odim % 128 == 0) or (B == 1)
    n_rows = T if time_major_ok else B * T

    tile = row_tile if row_tile is not None else _pick_row_tile(
        n_rows, idim, odim, in_bytes, out_bytes)
    tile = max(8, _round_up(int(tile), 8))

    vmem_limit = int(min(
        64 * 1024 * 1024,          # safe on v7x (64 MiB physical VMEM)
        max(32 * 1024 * 1024,
            2 * _vmem_bytes_estimate(tile, idim, odim, in_bytes, out_bytes))))

    def build(single_buffer_invariants):
        if single_buffer_invariants:
            def inv_spec(shape):
                return pl.BlockSpec(shape, lambda *_: (0,) * len(shape),
                                    pipeline_mode=pl.Buffered(1))
        else:
            def inv_spec(shape):
                return pl.BlockSpec(shape, lambda *_: (0,) * len(shape))

        shared = [inv_spec((idim, odim)),   # weight (grid-invariant, resident)
                  inv_spec((1, odim)),      # bias
                  inv_spec((1, odim)),      # ln gamma
                  inv_spec((1, odim))]      # ln beta

        if time_major_ok:
            grid = (B, pl.cdiv(T, tile))
            in_specs = [pl.BlockSpec((None, tile, idim),
                                     lambda b, t: (b, t, 0))] + shared
            # [T, B*odim] view: block (tile, odim) at lane offset b*odim ->
            # lane-dense stores, reshapes to [T, B, odim] for free.
            out_specs = pl.BlockSpec((tile, odim), lambda b, t: (t, b))
            out_shape = jax.ShapeDtypeStruct((T, B * odim), out_dtype)
            dims = ("parallel", "parallel")
        else:
            grid = (pl.cdiv(B * T, tile),)
            in_specs = [pl.BlockSpec((tile, idim), lambda i: (i, 0))] + shared
            out_specs = pl.BlockSpec((tile, odim), lambda i: (i, 0))
            out_shape = jax.ShapeDtypeStruct((B * T, odim), out_dtype)
            dims = ("parallel",)

        return pl.pallas_call(
            kernel,
            out_shape=out_shape,
            grid_spec=pltpu.PrefetchScalarGridSpec(
                num_scalar_prefetch=0,
                grid=grid,
                in_specs=in_specs,
                out_specs=out_specs,
            ),
            compiler_params=pltpu.CompilerParams(
                dimension_semantics=dims,
                vmem_limit_bytes=vmem_limit),
        )

    x_in = x if time_major_ok else x.reshape(B * T, idim)
    try:
        out2d = build(True)(x_in, w, b2d, g2d, beta2d)
    except Exception:
        # pl.Buffered(1) single-buffering unsupported on this jax/backend:
        # retry with default double-buffered invariant operands.
        out2d = build(False)(x_in, w, b2d, g2d, beta2d)

    if time_major_ok:
        out = out2d.reshape(T, B, odim)                       # free reshape
    else:
        out = jnp.transpose(out2d.reshape(B, T, odim), (1, 0, 2))

    # get_out_seq_lens_tensor is the identity (clone) for this module.
    return out, src_lengths


def _reference(src_tokens, weight, bias, gamma, beta, eps=1e-5):
    y = jnp.einsum("bti,io->bto", src_tokens, weight,
                   preferred_element_type=jnp.float32) + bias
    mean = jnp.mean(y, axis=-1, keepdims=True)
    var = jnp.mean((y - mean) ** 2, axis=-1, keepdims=True)
    y = (y - mean) * jax.lax.rsqrt(var + eps) * gamma + beta
    y = jnp.maximum(y, 0.0).astype(src_tokens.dtype)
    return jnp.transpose(y, (1, 0, 2))


if __name__ == "__main__":
    # Small shapes; odim multiple of 128 exercises the transpose-free path,
    # T=20 exercises the ragged (partial trailing block) handling.
    B, T, idim, odim = 2, 20, 64, 128

    key = jax.random.PRNGKey(0)
    k1, k2, k3, k4, k5 = jax.random.split(key, 5)

    src_tokens = jax.random.normal(k1, (B, T, idim), dtype=jnp.float32)
    src_lengths = jnp.full((B,), T, dtype=jnp.int32)

    # nn.Linear init: U(-1/sqrt(idim), 1/sqrt(idim)) for weight and bias.
    bound = 1.0 / (idim ** 0.5)
    weight = jax.random.uniform(k2, (idim, odim), minval=-bound, maxval=bound,
                                dtype=jnp.float32)
    bias = jax.random.uniform(k3, (odim,), minval=-bound, maxval=bound,
                              dtype=jnp.float32)
    # nn.LayerNorm default init (gamma=1, beta=0); perturbed so the affine
    # path is exercised.
    gamma = jnp.ones((odim,), jnp.float32) + 0.01 * jax.random.normal(
        k4, (odim,), dtype=jnp.float32)
    beta = 0.01 * jax.random.normal(k5, (odim,), dtype=jnp.float32)

    ref = _reference(src_tokens, weight, bias, gamma, beta)

    # 1) f32 MXU operands: tight check (time-major path).
    out_f32, lens = linear_layer_forward(src_tokens, src_lengths, weight, bias,
                                         gamma, beta, mxu_dtype=jnp.float32)
    out_f32 = jax.block_until_ready(out_f32)
    assert out_f32.shape == (T, B, odim)
    assert jnp.array_equal(lens, src_lengths)
    assert jnp.allclose(out_f32, ref, atol=1e-4, rtol=1e-4), \
        float(jnp.max(jnp.abs(out_f32 - ref)))

    # 2) Default bf16 MXU operands (f32 accumulate + f32 LayerNorm): loose check.
    out_bf16, _ = linear_layer_forward(src_tokens, src_lengths, weight, bias,
                                       gamma, beta)
    out_bf16 = jax.block_until_ready(out_bf16)
    assert jnp.allclose(out_bf16, ref, atol=5e-2, rtol=5e-2), \
        float(jnp.max(jnp.abs(out_bf16 - ref)))

    # 3) Fallback path (odim not a multiple of 128 with B > 1).
    odim2 = 96
    w2, b2, g2, be2 = weight[:, :odim2], bias[:odim2], gamma[:odim2], beta[:odim2]
    ref2 = _reference(src_tokens, w2, b2, g2, be2)
    out2, _ = linear_layer_forward(src_tokens, src_lengths, w2, b2, g2, be2,
                                   mxu_dtype=jnp.float32)
    out2 = jax.block_until_ready(out2)
    assert out2.shape == (T, B, odim2)
    assert jnp.allclose(out2, ref2, atol=1e-4, rtol=1e-4)

    print("KERNEL_OK")
</pallas_src>

<mosaic_0001>
module attributes {stable_mosaic.version = 11 : i64} {
  func.func @_linear_ln_relu_kernel(%arg0: i32, %arg1: i32, %arg2: memref<1x24x64xf32, #tpu.memory_space<vmem>>, %arg3: memref<64x128xf32, #tpu.memory_space<vmem>>, %arg4: memref<1x128xf32, #tpu.memory_space<vmem>>, %arg5: memref<1x128xf32, #tpu.memory_space<vmem>>, %arg6: memref<1x128xf32, #tpu.memory_space<vmem>>, %arg7: memref<24x128xf32, #tpu.memory_space<vmem>>) attributes {dimension_semantics = [#tpu.dimension_semantics<parallel>, #tpu.dimension_semantics<parallel>], iteration_bounds = array<i64: 2, 1>, scalar_prefetch = 0 : i64, scratch_operands = 0 : i64, tpu.core_type = #tpu.core_type<tc>, window_params = [{transform_indices = @transform_0, window_bounds = array<i64: 1, 24, 64>}, {pipeline_mode = #tpu.pipeline_mode<synchronous>, transform_indices = @transform_1, window_bounds = array<i64: 64, 128>}, {pipeline_mode = #tpu.pipeline_mode<synchronous>, transform_indices = @transform_2, window_bounds = array<i64: 1, 128>}, {pipeline_mode = #tpu.pipeline_mode<synchronous>, transform_indices = @transform_3, window_bounds = array<i64: 1, 128>}, {pipeline_mode = #tpu.pipeline_mode<synchronous>, transform_indices = @transform_4, window_bounds = array<i64: 1, 128>}, {transform_indices = @transform_5, window_bounds = array<i64: 24, 128>}]} {
    %c0 = arith.constant 0 : index
    %c0_0 = arith.constant 0 : index
    %c0_1 = arith.constant 0 : index
    %0 = vector.load %arg2[%c0, %c0_0, %c0_1] : memref<1x24x64xf32, #tpu.memory_space<vmem>>, vector<1x24x64xf32>
    %1 = vector.shape_cast %0 : vector<1x24x64xf32> to vector<24x64xf32>
    %c0_2 = arith.constant 0 : index
    %c0_3 = arith.constant 0 : index
    %2 = vector.load %arg3[%c0_2, %c0_3] : memref<64x128xf32, #tpu.memory_space<vmem>>, vector<64x128xf32>
    %cst = arith.constant dense<0.000000e+00> : vector<24x128xf32>
    %3 = tpu.matmul %1, %2, %cst {dimension_numbers = #tpu.dot_dimension_numbers<[1], [0], [0], [1], [0, 0, 1, 1], [], []>} : vector<24x64xf32>, vector<64x128xf32>, vector<24x128xf32> -> vector<24x128xf32>
    %c0_4 = arith.constant 0 : index
    %c0_5 = arith.constant 0 : index
    %4 = vector.load %arg4[%c0_4, %c0_5] : memref<1x128xf32, #tpu.memory_space<vmem>>, vector<1x128xf32>
    %5 = vector.broadcast %4 : vector<1x128xf32> to vector<24x128xf32>
    %6 = arith.addf %3, %5 : vector<24x128xf32>
    %cst_6 = arith.constant dense<0.000000e+00> : vector<24xf32>
    %7 = vector.multi_reduction <add>, %6, %cst_6 [1] : vector<24x128xf32> to vector<24xf32>
    %8 = vector.shape_cast %7 : vector<24xf32> to vector<24x1xf32>
    %cst_7 = arith.constant 1.280000e+02 : f32
    %9 = vector.broadcast %cst_7 : f32 to vector<24x1xf32>
    %10 = arith.divf %8, %9 : vector<24x1xf32>
    %11 = vector.broadcast %10 : vector<24x1xf32> to vector<24x128xf32>
    %12 = arith.subf %6, %11 : vector<24x128xf32>
    %13 = arith.mulf %12, %12 : vector<24x128xf32>
    %cst_8 = arith.constant dense<0.000000e+00> : vector<24xf32>
    %14 = vector.multi_reduction <add>, %13, %cst_8 [1] : vector<24x128xf32> to vector<24xf32>
    %15 = vector.shape_cast %14 : vector<24xf32> to vector<24x1xf32>
    %cst_9 = arith.constant 1.280000e+02 : f32
    %16 = vector.broadcast %cst_9 : f32 to vector<24x1xf32>
    %17 = arith.divf %15, %16 : vector<24x1xf32>
    %cst_10 = arith.constant 9.99999974E-6 : f32
    %18 = vector.broadcast %cst_10 : f32 to vector<24x1xf32>
    %19 = arith.addf %17, %18 : vector<24x1xf32>
    %20 = math.rsqrt %19 : vector<24x1xf32>
    %21 = vector.broadcast %20 : vector<24x1xf32> to vector<24x128xf32>
    %22 = arith.mulf %12, %21 : vector<24x128xf32>
    %c0_11 = arith.constant 0 : index
    %c0_12 = arith.constant 0 : index
    %23 = vector.load %arg5[%c0_11, %c0_12] : memref<1x128xf32, #tpu.memory_space<vmem>>, vector<1x128xf32>
    %24 = vector.broadcast %23 : vector<1x128xf32> to vector<24x128xf32>
    %25 = arith.mulf %22, %24 : vector<24x128xf32>
    %c0_13 = arith.constant 0 : index
    %c0_14 = arith.constant 0 : index
    %26 = vector.load %arg6[%c0_13, %c0_14] : memref<1x128xf32, #tpu.memory_space<vmem>>, vector<1x128xf32>
    %27 = vector.broadcast %26 : vector<1x128xf32> to vector<24x128xf32>
    %28 = arith.addf %25, %27 : vector<24x128xf32>
    %cst_15 = arith.constant 0.000000e+00 : f32
    %29 = vector.broadcast %cst_15 : f32 to vector<24x128xf32>
    %30 = arith.maximumf %28, %29 : vector<24x128xf32>
    %c0_16 = arith.constant 0 : index
    %c0_17 = arith.constant 0 : index
    %31 = vector.load %arg7[%c0_16, %c0_17] : memref<24x128xf32, #tpu.memory_space<vmem>>, vector<24x128xf32>
    tpu.vector_store %arg7[%c0_16, %c0_17], %30 {strides = array<i32>} : memref<24x128xf32, #tpu.memory_space<vmem>>, vector<24x128xf32>,
    return
  }
  func.func @transform_0(%arg0: i32, %arg1: i32) -> (i32, i32, i32) {
    %c0_i32 = arith.constant 0 : i32
    %c0_i32_0 = arith.constant 0 : i32
    return %arg0, %arg1, %c0_i32 : i32, i32, i32
  }
  func.func @transform_1(%arg0: i32, %arg1: i32) -> (i32, i32) {
    %c0_i32 = arith.constant 0 : i32
    %c0_i32_0 = arith.constant 0 : i32
    %c0_i32_1 = arith.constant 0 : i32
    return %c0_i32, %c0_i32_0 : i32, i32
  }
  func.func @transform_2(%arg0: i32, %arg1: i32) -> (i32, i32) {
    %c0_i32 = arith.constant 0 : i32
    %c0_i32_0 = arith.constant 0 : i32
    %c0_i32_1 = arith.constant 0 : i32
    return %c0_i32, %c0_i32_0 : i32, i32
  }
  func.func @transform_3(%arg0: i32, %arg1: i32) -> (i32, i32) {
    %c0_i32 = arith.constant 0 : i32
    %c0_i32_0 = arith.constant 0 : i32
    %c0_i32_1 = arith.constant 0 : i32
    return %c0_i32, %c0_i32_0 : i32, i32
  }
  func.func @transform_4(%arg0: i32, %arg1: i32) -> (i32, i32) {
    %c0_i32 = arith.constant 0 : i32
    %c0_i32_0 = arith.constant 0 : i32
    %c0_i32_1 = arith.constant 0 : i32
    return %c0_i32, %c0_i32_0 : i32, i32
  }
  func.func @transform_5(%arg0: i32, %arg1: i32) -> (i32, i32) {
    %c0_i32 = arith.constant 0 : i32
    return %arg1, %arg0 : i32, i32
  }
}

module attributes {stable_mosaic.version = 11 : i64} {
  func.func @_linear_ln_relu_kernel(%arg0: i32, %arg1: i32, %arg2: memref<1x24x64xf32, #tpu.memory_space<vmem>>, %arg3: memref<64x128xf32, #tpu.memory_space<vmem>>, %arg4: memref<1x128xf32, #tpu.memory_space<vmem>>, %arg5: memref<1x128xf32, #tpu.memory_space<vmem>>, %arg6: memref<1x128xf32, #tpu.memory_space<vmem>>, %arg7: memref<24x128xf32, #tpu.memory_space<vmem>>) attributes {dimension_semantics = [#tpu.dimension_semantics<parallel>, #tpu.dimension_semantics<parallel>], iteration_bounds = array<i64: 2, 1>, scalar_prefetch = 0 : i64, scratch_operands = 0 : i64, tpu.core_type = #tpu.core_type<tc>, window_params = [{transform_indices = @transform_0, window_bounds = array<i64: 1, 24, 64>}, {pipeline_mode = #tpu.pipeline_mode<synchronous>, transform_indices = @transform_1, window_bounds = array<i64: 64, 128>}, {pipeline_mode = #tpu.pipeline_mode<synchronous>, transform_indices = @transform_2, window_bounds = array<i64: 1, 128>}, {pipeline_mode = #tpu.pipeline_mode<synchronous>, transform_indices = @transform_3, window_bounds = array<i64: 1, 128>}, {pipeline_mode = #tpu.pipeline_mode<synchronous>, transform_indices = @transform_4, window_bounds = array<i64: 1, 128>}, {transform_indices = @transform_5, window_bounds = array<i64: 24, 128>}]} {
    %c0 = arith.constant 0 : index
    %c0_0 = arith.constant 0 : index
    %c0_1 = arith.constant 0 : index
    %0 = vector.load %arg2[%c0, %c0_0, %c0_1] : memref<1x24x64xf32, #tpu.memory_space<vmem>>, vector<1x24x64xf32>
    %1 = vector.shape_cast %0 : vector<1x24x64xf32> to vector<24x64xf32>
    %c0_2 = arith.constant 0 : index
    %c0_3 = arith.constant 0 : index
    %2 = vector.load %arg3[%c0_2, %c0_3] : memref<64x128xf32, #tpu.memory_space<vmem>>, vector<64x128xf32>
    %cst = arith.constant dense<0.000000e+00> : vector<24x128xf32>
    %3 = tpu.matmul %1, %2, %cst {dimension_numbers = #tpu.dot_dimension_numbers<[1], [0], [0], [1], [0, 0, 1, 1], [], []>} : vector<24x64xf32>, vector<64x128xf32>, vector<24x128xf32> -> vector<24x128xf32>
    %c0_4 = arith.constant 0 : index
    %c0_5 = arith.constant 0 : index
    %4 = vector.load %arg4[%c0_4, %c0_5] : memref<1x128xf32, #tpu.memory_space<vmem>>, vector<1x128xf32>
    %5 = vector.broadcast %4 : vector<1x128xf32> to vector<24x128xf32>
    %6 = arith.addf %3, %5 : vector<24x128xf32>
    %cst_6 = arith.constant dense<0.000000e+00> : vector<24xf32>
    %7 = vector.multi_reduction <add>, %6, %cst_6 [1] : vector<24x128xf32> to vector<24xf32>
    %8 = vector.shape_cast %7 : vector<24xf32> to vector<24x1xf32>
    %cst_7 = arith.constant 1.280000e+02 : f32
    %9 = vector.broadcast %cst_7 : f32 to vector<24x1xf32>
    %10 = arith.divf %8, %9 : vector<24x1xf32>
    %11 = vector.broadcast %10 : vector<24x1xf32> to vector<24x128xf32>
    %12 = arith.subf %6, %11 : vector<24x128xf32>
    %13 = arith.mulf %12, %12 : vector<24x128xf32>
    %cst_8 = arith.constant dense<0.000000e+00> : vector<24xf32>
    %14 = vector.multi_reduction <add>, %13, %cst_8 [1] : vector<24x128xf32> to vector<24xf32>
    %15 = vector.shape_cast %14 : vector<24xf32> to vector<24x1xf32>
    %cst_9 = arith.constant 1.280000e+02 : f32
    %16 = vector.broadcast %cst_9 : f32 to vector<24x1xf32>
    %17 = arith.divf %15, %16 : vector<24x1xf32>
    %cst_10 = arith.constant 9.99999974E-6 : f32
    %18 = vector.broadcast %cst_10 : f32 to vector<24x1xf32>
    %19 = arith.addf %17, %18 : vector<24x1xf32>
    %20 = math.rsqrt %19 : vector<24x1xf32>
    %21 = vector.broadcast %20 : vector<24x1xf32> to vector<24x128xf32>
    %22 = arith.mulf %12, %21 : vector<24x128xf32>
    %c0_11 = arith.constant 0 : index
    %c0_12 = arith.constant 0 : index
    %23 = vector.load %arg5[%c0_11, %c0_12] : memref<1x128xf32, #tpu.memory_space<vmem>>, vector<1x128xf32>
    %24 = vector.broadcast %23 : vector<1x128xf32> to vector<24x128xf32>
    %25 = arith.mulf %22, %24 : vector<24x128xf32>
    %c0_13 = arith.constant 0 : index
    %c0_14 = arith.constant 0 : index
    %26 = vector.load %arg6[%c0_13, %c0_14] : memref<1x128xf32, #tpu.memory_space<vmem>>, vector<1x128xf32>
    %27 = vector.broadcast %26 : vector<1x128xf32> to vector<24x128xf32>
    %28 = arith.addf %25, %27 : vector<24x128xf32>
    %cst_15 = arith.constant 0.000000e+00 : f32
    %29 = vector.broadcast %cst_15 : f32 to vector<24x128xf32>
    %30 = arith.maximumf %28, %29 : vector<24x128xf32>
    %c0_16 = arith.constant 0 : index
    %c0_17 = arith.constant 0 : index
    %31 = vector.load %arg7[%c0_16, %c0_17] : memref<24x128xf32, #tpu.memory_space<vmem>>, vector<24x128xf32>
    tpu.vector_store %arg7[%c0_16, %c0_17], %30 {strides = array<i32>} : memref<24x128xf32, #tpu.memory_space<vmem>>, vector<24x128xf32>,
    return
  }
  func.func @transform_0(%arg0: i32, %arg1: i32) -> (i32, i32, i32) {
    %c0_i32 = arith.constant 0 : i32
    %c0_i32_0 = arith.constant 0 : i32
    return %arg0, %arg1, %c0_i32 : i32, i32, i32
  }
  func.func @transform_1(%arg0: i32, %arg1: i32) -> (i32, i32) {
    %c0_i32 = arith.constant 0 : i32
    %c0_i32_0 = arith.constant 0 : i32
    %c0_i32_1 = arith.constant 0 : i32
    return %c0_i32, %c0_i32_0 : i32, i32
  }
  func.func @transform_2(%arg0: i32, %arg1: i32) -> (i32, i32) {
    %c0_i32 = arith.constant 0 : i32
    %c0_i32_0 = arith.constant 0 : i32
    %c0_i32_1 = arith.constant 0 : i32
    return %c0_i32, %c0_i32_0 : i32, i32
  }
  func.func @transform_3(%arg0: i32, %arg1: i32) -> (i32, i32) {
    %c0_i32 = arith.constant 0 : i32
    %c0_i32_0 = arith.constant 0 : i32
    %c0_i32_1 = arith.constant 0 : i32
    return %c0_i32, %c0_i32_0 : i32, i32
  }
  func.func @transform_4(%arg0: i32, %arg1: i32) -> (i32, i32) {
    %c0_i32 = arith.constant 0 : i32
    %c0_i32_0 = arith.constant 0 : i32
    %c0_i32_1 = arith.constant 0 : i32
    return %c0_i32, %c0_i32_0 : i32, i32
  }
  func.func @transform_5(%arg0: i32, %arg1: i32) -> (i32, i32) {
    %c0_i32 = arith.constant 0 : i32
    return %arg1, %arg0 : i32, i32
  }
}

</mosaic_0001>

<llo_original>
// kernel: tpu_custom_call.1
$region0: #{tpu_custom_call.1}
  #allocation0 [shape = 'u32[]', space=smem, size = 0x4, offset = 0x4, fixed_abs, tag = 'smem constant byte address 0x4 - core index']
  #allocation1 [shape = 'u32[144,128]{1,0:T(1,128)}', space=vmem, size = 0x12000, scoped, tag = 'internal scratch']
  %s0 = inlined_call_operand.vmem [shape: f32[2,20,64], index: 0, kind: input, shape index: {}]
  %s1 = inlined_call_operand.vmem [shape: f32[64,128], index: 1, kind: input, shape index: {}]
  %s2 = inlined_call_operand.vmem [shape: f32[1,128], index: 2, kind: input, shape index: {}]
  %s3 = inlined_call_operand.vmem [shape: f32[1,128], index: 3, kind: input, shape index: {}]
  %s4 = inlined_call_operand.vmem [shape: f32[1,128], index: 4, kind: input, shape index: {}]
  %s5 = inlined_call_operand.hbm [shape: f32[20,256], index: 5, kind: output, shape index: {}]
  %s6 = sld [smem:[#allocation0]]
  $region53: #{tpu_custom_call.1} parent=0
    _
  %s8 = ssub.s32 1, %s6
  %s9 = scalar_select 0, %s8, %s6
  $region1: #{tpu_custom_call.1} parent=0
    #allocation2 [shape = 'u8[24576]{0}', space=vmem, size = 0x6000, scoped, tag = 'output window, operand 0']
    #allocation3 [shape = 's32[2]{0}', space=sflag, size = 0x8, scoped, tag = 'scoped memory for tpu_custom_call.1']
    %10 = vsyncpa [#allocation3], 0
    %s11 = scalar_lea.sflag [#allocation3], 1
    %12 = vsyncpa %s11, 0
    loop: start=0, step=1, limit=4
    $region2: #{tpu_custom_call.1} parent=1 // loop_pre_header
      _
    $region3: #{tpu_custom_call.1} parent=1 // loop_header
      %s14 = sphi 0, %s18
      %p15 = scmp.ge.s32.totalorder %s14, 4
      %s21 = sphi 0, %s33
      %s22 = sphi 0, %s29
      %s23 = sphi 0, %s21
      %s24 = sphi 0, %s22
      %s25 = sphi 0, %s23
      %s26 = sphi 0, %s24
      %s38 = sphi 0, %s40
      %s41 = sphi 0, %s38
      %s42 = sphi 0, %s41
      %s58 = sphi 0, %s42
      %s62 = sphi 0, %s62
      %s64 = sphi 0, %s62
      %s65 = sphi 0, %s64
      %s79 = sphi 0, %s65
      %s83 = sphi 0, %s83
      %s85 = sphi 0, %s83
      %s86 = sphi 0, %s85
      %s100 = sphi 0, %s86
      %s104 = sphi 0, %s104
      %s106 = sphi 0, %s104
      %s107 = sphi 0, %s106
      %s121 = sphi 0, %s107
      %s125 = sphi 0, %s125
      %s127 = sphi 0, %s125
      %s128 = sphi 0, %s127
      %s142 = sphi 0, %s128
      %s150 = sphi 0, %s152
      %s153 = sphi 0, %s150
      %s154 = sphi 0, %s153
      %s170 = sphi 0, %s154
    $region4: #{tpu_custom_call.1} parent=1 // loop_header_branch
      %17 = sbr.rel (%p15) target = $region8
    $region5: #{tpu_custom_call.1} parent=1 // loop_body
      %s19 = ssub.s32 %s14, 1
      %s20 = ssub.s32 %s14, 2
      %s27 = sadd.s32 1, %s22
      %p28 = scmp.ge.s32.totalorder %s27, 1
      %s29 = scalar_select %p28, 0, %s27
      %s30 = sadd.s32 1, %s21
      %s31 = scalar_select %p28, %s30, %s21
      %p32 = scmp.ge.s32.totalorder %s31, 2
      %s33 = scalar_select %p32, 0, %s31
      %s34 = ssub.s32 %s21, %s33
      %s35 = ssub.s32 %s22, %s29
      %s36 = sor.u32 %s34, %s35
      %p37 = scmp.eq.s32.totalorder %s36, 0
      %s39 = sadd.s32 %s38, 1
      %s40 = scalar_select %p37, %s38, %s39
      %p43 = pneg %p37
      %p44 = scmp.eq.s32.totalorder %s14, 1
      %p45 = por %p43, %p44
      %p46 = scmp.ne.s32.totalorder %s38, %s41
      %p47 = scmp.eq.s32.totalorder %s14, 0
      %p48 = por %p46, %p47
      %p49 = scmp.ne.s32.totalorder %s38, %s41
      %p50 = scmp.eq.s32.totalorder %s19, 1
      %p51 = por %p49, %p50
      %p52 = scmp.ne.s32.totalorder %s41, %s42
      %p53 = scmp.eq.s32.totalorder %s19, 0
      %p54 = por %p52, %p53
      %p55 = scmp.ne.s32.totalorder %s41, %s42
      %p56 = scmp.eq.s32.totalorder %s20, 1
      %p57 = por %p55, %p56
      %p59 = scmp.ne.s32.totalorder %s42, %s58
      %p60 = scmp.eq.s32.totalorder %s20, 0
      %p61 = por %p59, %p60
      %s63 = sadd.s32 %s62, 1
      %p66 = scmp.eq.s32.totalorder %s14, 1
      %p67 = scmp.ne.s32.totalorder %s62, %s64
      %p68 = scmp.eq.s32.totalorder %s14, 0
      %p69 = por %p67, %p68
      %p70 = scmp.ne.s32.totalorder %s62, %s64
      %p71 = scmp.eq.s32.totalorder %s19, 1
      %p72 = por %p70, %p71
      %p73 = scmp.ne.s32.totalorder %s64, %s65
      %p74 = scmp.eq.s32.totalorder %s19, 0
      %p75 = por %p73, %p74
      %p76 = scmp.ne.s32.totalorder %s64, %s65
      %p77 = scmp.eq.s32.totalorder %s20, 1
      %p78 = por %p76, %p77
      %p80 = scmp.ne.s32.totalorder %s65, %s79
      %p81 = scmp.eq.s32.totalorder %s20, 0
      %p82 = por %p80, %p81
      %s84 = sadd.s32 %s83, 1
      %p87 = scmp.eq.s32.totalorder %s14, 1
      %p88 = scmp.ne.s32.totalorder %s83, %s85
      %p89 = scmp.eq.s32.totalorder %s14, 0
      %p90 = por %p88, %p89
      %p91 = scmp.ne.s32.totalorder %s83, %s85
      %p92 = scmp.eq.s32.totalorder %s19, 1
      %p93 = por %p91, %p92
      %p94 = scmp.ne.s32.totalorder %s85, %s86
      %p95 = scmp.eq.s32.totalorder %s19, 0
      %p96 = por %p94, %p95
      %p97 = scmp.ne.s32.totalorder %s85, %s86
      %p98 = scmp.eq.s32.totalorder %s20, 1
      %p99 = por %p97, %p98
      %p101 = scmp.ne.s32.totalorder %s86, %s100
      %p102 = scmp.eq.s32.totalorder %s20, 0
      %p103 = por %p101, %p102
      %s105 = sadd.s32 %s104, 1
      %p108 = scmp.eq.s32.totalorder %s14, 1
      %p109 = scmp.ne.s32.totalorder %s104, %s106
      %p110 = scmp.eq.s32.totalorder %s14, 0
      %p111 = por %p109, %p110
      %p112 = scmp.ne.s32.totalorder %s104, %s106
      %p113 = scmp.eq.s32.totalorder %s19, 1
      %p114 = por %p112, %p113
      %p115 = scmp.ne.s32.totalorder %s106, %s107
      %p116 = scmp.eq.s32.totalorder %s19, 0
      %p117 = por %p115, %p116
      %p118 = scmp.ne.s32.totalorder %s106, %s107
      %p119 = scmp.eq.s32.totalorder %s20, 1
      %p120 = por %p118, %p119
      %p122 = scmp.ne.s32.totalorder %s107, %s121
      %p123 = scmp.eq.s32.totalorder %s20, 0
      %p124 = por %p122, %p123
      %s126 = sadd.s32 %s125, 1
      %p129 = scmp.eq.s32.totalorder %s14, 1
      %p130 = scmp.ne.s32.totalorder %s125, %s127
      %p131 = scmp.eq.s32.totalorder %s14, 0
      %p132 = por %p130, %p131
      %p133 = scmp.ne.s32.totalorder %s125, %s127
      %p134 = scmp.eq.s32.totalorder %s19, 1
      %p135 = por %p133, %p134
      %p136 = scmp.ne.s32.totalorder %s127, %s128
      %p137 = scmp.eq.s32.totalorder %s19, 0
      %p138 = por %p136, %p137
      %p139 = scmp.ne.s32.totalorder %s127, %s128
      %p140 = scmp.eq.s32.totalorder %s20, 1
      %p141 = por %p139, %p140
      %p143 = scmp.ne.s32.totalorder %s128, %s142
      %p144 = scmp.eq.s32.totalorder %s20, 0
      %p145 = por %p143, %p144
      %s146 = ssub.s32 %s22, %s29
      %s147 = ssub.s32 %s21, %s33
      %s148 = sor.u32 %s146, %s147
      %p149 = scmp.eq.s32.totalorder %s148, 0
      %s151 = sadd.s32 %s150, 1
      %s152 = scalar_select %p149, %s150, %s151
      %p155 = pneg %p149
      %p156 = scmp.eq.s32.totalorder %s14, 1
      %p157 = por %p155, %p156
      %p158 = scmp.ne.s32.totalorder %s150, %s153
      %p159 = scmp.eq.s32.totalorder %s14, 0
      %p160 = por %p158, %p159
      %p161 = scmp.ne.s32.totalorder %s150, %s153
      %p162 = scmp.eq.s32.totalorder %s19, 1
      %p163 = por %p161, %p162
      %p164 = scmp.ne.s32.totalorder %s153, %s154
      %p165 = scmp.eq.s32.totalorder %s19, 0
      %p166 = por %p164, %p165
      %p167 = scmp.ne.s32.totalorder %s153, %s154
      %p168 = scmp.eq.s32.totalorder %s20, 1
      %p169 = por %p167, %p168
      %p171 = scmp.ne.s32.totalorder %s154, %s170
      %p172 = scmp.eq.s32.totalorder %s20, 0
      %p173 = por %p171, %p172
      %p174 = scmp.le.s32.totalorder 1, %s14
      %p175 = scmp.lt.s32.totalorder %s14, 3
      %p176 = pnand %p174, %p175
      %p177 = pneg %p176
      // Predicated region
      $region9: #{tpu_custom_call.1} parent=5 // pred_check
        _
      $region10: #{tpu_custom_call.1} parent=5 // pred_check_branch
        %179 = sbr.rel (%p176) target = $region12
      $region11: #{tpu_custom_call.1} parent=5 // pred_region
        %s180 = ssub.s32 %s14, 1
        // Predicated region
        $region13: #{tpu_custom_call.1} parent=11 // pred_check
          %p181 = pneg %p75
        $region14: #{tpu_custom_call.1} parent=11 // pred_check_branch
          %183 = sbr.rel (%p181) target = $region16
        $region15: #{tpu_custom_call.1} parent=11 // pred_region
          _
        $region16: #{tpu_custom_call.1} parent=11 // pred_fallthru
          _
        // Predicated region
        $region17: #{tpu_custom_call.1} parent=11 // pred_check
          %p184 = pneg %p96
        $region18: #{tpu_custom_call.1} parent=11 // pred_check_branch
          %186 = sbr.rel (%p184) target = $region20
        $region19: #{tpu_custom_call.1} parent=11 // pred_region
          _
        $region20: #{tpu_custom_call.1} parent=11 // pred_fallthru
          _
        // Predicated region
        $region21: #{tpu_custom_call.1} parent=11 // pred_check
          %p187 = pneg %p117
        $region22: #{tpu_custom_call.1} parent=11 // pred_check_branch
          %189 = sbr.rel (%p187) target = $region24
        $region23: #{tpu_custom_call.1} parent=11 // pred_region
          _
        $region24: #{tpu_custom_call.1} parent=11 // pred_fallthru
          _
        // Predicated region
        $region25: #{tpu_custom_call.1} parent=11 // pred_check
          %p190 = pneg %p138
        $region26: #{tpu_custom_call.1} parent=11 // pred_check_branch
          %192 = sbr.rel (%p190) target = $region28
        $region27: #{tpu_custom_call.1} parent=11 // pred_region
          _
        $region28: #{tpu_custom_call.1} parent=11 // pred_fallthru
          _
      $region12: #{tpu_custom_call.1} parent=5 // pred_fallthru
        _
      %p193 = scmp.lt.s32.totalorder %s14, 2
      // Predicated region
      $region29: #{tpu_custom_call.1} parent=5 // pred_check
        %p194 = pneg %p193
      $region30: #{tpu_custom_call.1} parent=5 // pred_check_branch
        %196 = sbr.rel (%p194) target = $region32
      $region31: #{tpu_custom_call.1} parent=5 // pred_region
        // Predicated region
        $region33: #{tpu_custom_call.1} parent=31 // pred_check
          %p197 = pneg %p48
        $region34: #{tpu_custom_call.1} parent=31 // pred_check_branch
          %199 = sbr.rel (%p197) target = $region36
        $region35: #{tpu_custom_call.1} parent=31 // pred_region
          %s200 = smul.u32 3, %s22
          %p201 = scmp.lt.s32.totalorder %s21, 1
          %s202 = scalar_select %p201, %s21, 1
          %p203 = scmp.lt.s32.totalorder %s200, 2
          %s204 = scalar_select %p203, %s200, 2
          %s205 = smul.addr %s202, 3
          %s206 = sadd.s32 %s204, %s205
          %s207 = smul.addr %s206, 8
          %s208 = scalar_lea.vmem %s0, %s207
          %s209 = smul.u32 3, %s22
        $region36: #{tpu_custom_call.1} parent=31 // pred_fallthru
          _
      $region32: #{tpu_custom_call.1} parent=5 // pred_fallthru
        _
      %p210 = scmp.le.s32.totalorder 1, %s14
      %p211 = scmp.lt.s32.totalorder %s14, 3
      %p212 = pnand %p210, %p211
      %p213 = pneg %p212
      // Predicated region
      $region37: #{tpu_custom_call.1} parent=5 // pred_check
        _
      $region38: #{tpu_custom_call.1} parent=5 // pred_check_branch
        %215 = sbr.rel (%p212) target = $region40
      $region39: #{tpu_custom_call.1} parent=5 // pred_region
        %s216 = ssub.s32 %s14, 1
        %s217 = smul.u32 3, %s24
        %p218 = scmp.lt.s32.totalorder %s23, 1
        %s219 = scalar_select %p218, %s23, 1
        %p220 = scmp.lt.s32.totalorder %s217, 2
        %s221 = scalar_select %p220, %s217, 2
        %s222 = smul.addr %s219, 3
        %s223 = sadd.s32 %s221, %s222
        %s224 = smul.addr %s223, 8
        %s225 = scalar_lea.vmem %s0, %s224
        %p226 = pneg %p54
        %p227 = pneg %p51
        %p228 = pneg %p75
        %p229 = pneg %p72
        %p230 = pneg %p96
        %p231 = pneg %p93
        %p232 = pneg %p117
        %p233 = pneg %p114
        %p234 = pneg %p138
        %p235 = pneg %p135
        %p236 = pneg %p166
        %p237 = pneg %p163
        %s238 = sand.u32 %s153, 1
        %s239 = scalar_lea.sflag [#allocation3], %s238
        %s240 = sand.u32 %s153, 1
        %s241 = smul.addr %s240, 24
        %s242 = scalar_lea.vmem [#allocation2], %s241
        %s243 = smul.u32 3, %s24
        %p244 = scmp.lt.s32.totalorder %s23, 1
        %s245 = scalar_select %p244, %s23, 1
        %p246 = scmp.lt.s32.totalorder %s243, 2
        %s247 = scalar_select %p246, %s243, 2
        %s248 = smul.addr %s245, 3
        %s249 = sadd.s32 %s247, %s248
        %s250 = smul.addr %s249, 8
        %s251 = scalar_lea.vmem %s0, %s250
        %s252 = smul.u32 3, %s24
        %s253 = smul.u32 3, %s24
        %v254 = vld [vmem:[%s251] sm:$0xff]
        %v255 = vld [vmem:[%s251 + $0x8] sm:$0xff]
        %v256 = vld [vmem:[%s251 + $0x10] sm:$0xff]
        %v257 = vld [vmem:[%s1] sm:$0xff]
        %v258 = vld [vmem:[%s1 + $0x8] sm:$0xff]
        %v259 = vld [vmem:[%s1 + $0x10] sm:$0xff]
        %v260 = vld [vmem:[%s1 + $0x18] sm:$0xff]
        %v261 = vld [vmem:[%s1 + $0x20] sm:$0xff]
        %v262 = vld [vmem:[%s1 + $0x28] sm:$0xff]
        %v263 = vld [vmem:[%s1 + $0x30] sm:$0xff]
        %v264 = vld [vmem:[%s1 + $0x38] sm:$0xff]
        %v265 = vld [vmem:[%s2] sm:$0x1]
        %v267 = vlaneseq
        %v268 = vshrl.u32 %v267, 7
        %v269 = vsub.s32 0, %v268
        %v270 = vrot.slane %v265, %v269
        %vm272 = vcmask 523264
        %v274 = vsel %vm272, %v254, 0
        %v277 = vsel %vm272, %v255, 0
        %v280 = vsel %vm272, %v256, 0
        %282 = vmatprep.subr.mxu0 0.0
        %283 = vmatpush1.msra.mxu0 %v257
        %284 = vmatprep.subr.mxu0 0.0
        %285 = vmatpush1.msra.mxu0 %v258
        %286 = vmatprep.subr.mxu0 0.0
        %287 = vmatpush1.msra.mxu0 %v259
        %288 = vmatprep.subr.mxu0 0.0
        %289 = vmatpush1.msra.mxu0 %v260
        %290 = vmatprep.subr.mxu0 0.0
        %291 = vmatpush1.msra.mxu0 %v261
        %292 = vmatprep.subr.mxu0 0.0
        %293 = vmatpush1.msra.mxu0 %v262
        %294 = vmatprep.subr.mxu0 0.0
        %295 = vmatpush1.msra.mxu0 %v263
        %296 = vmatprep.subr.mxu0 0.0
        %297 = vmatpush1.msra.mxu0 %v264
        %298 = vmatprep.subr.mxu0 0.0
        %299 = vmatpush1.msra.mxu0 0.0
        %300 = vmatprep.subr.mxu0 0.0
        %301 = vmatpush1.msra.mxu0 0.0
        %302 = vmatprep.subr.mxu0 0.0
        %303 = vmatpush1.msra.mxu0 0.0
        %304 = vmatprep.subr.mxu0 0.0
        %305 = vmatpush1.msra.mxu0 0.0
        %306 = vmatprep.subr.mxu0 0.0
        %307 = vmatpush1.msra.mxu0 0.0
        %308 = vmatprep.subr.mxu0 0.0
        %309 = vmatpush1.msra.mxu0 0.0
        %310 = vmatprep.subr.mxu0 0.0
        %311 = vmatpush1.msra.mxu0 0.0
        %312 = vmatprep.subr.mxu0 0.0
        %313 = vmatpush1.msra.mxu0 0.0
        %314 = vmatprep.subr.mxu0 0.0
        %315 = vmatpush1.msra.mxu0 0.0
        %316 = vmatprep.subr.mxu0 0.0
        %317 = vmatpush1.msra.mxu0 0.0
        %318 = vmatprep.subr.mxu0 0.0
        %319 = vmatpush1.msra.mxu0 0.0
        %320 = vmatprep.subr.mxu0 0.0
        %321 = vmatpush1.msra.mxu0 0.0
        %322 = vmatprep.subr.mxu0 0.0
        %323 = vmatpush1.msra.mxu0 0.0
        %324 = vmatprep.subr.mxu0 0.0
        %325 = vmatpush1.msra.mxu0 0.0
        %326 = vmatprep.subr.mxu0 0.0
        %327 = vmatpush1.msra.mxu0 0.0
        %328 = vmatprep.subr.mxu0 0.0
        %329 = vmatpush1.msra.mxu0 0.0
        %330 = vmatprep.subr.mxu0 0.0
        %331 = vmatpush1.msra.mxu0 0.0
        %332 = vmatprep.subr.mxu0 0.0
        %333 = vmatpush1.msra.mxu0 0.0
        %334 = vmatprep.subr.mxu0 0.0
        %335 = vmatpush1.msra.mxu0 0.0
        %336 = vmatprep.subr.mxu0 0.0
        %337 = vmatpush1.msra.mxu0 0.0
        %338 = vmatprep.subr.mxu0 0.0
        %339 = vmatpush1.msra.mxu0 0.0
        %340 = vmatprep.subr.mxu0 0.0
        %341 = vmatpush1.msra.mxu0 0.0
        %342 = vmatprep.subr.mxu0 0.0
        %343 = vmatpush1.msra.mxu0 0.0
        %344 = vmatprep.subr.mxu0 0.0
        %345 = vmatpush1.msra.mxu0 0.0
        %346 = vmatprep.mubr.f32.mxu0 0.0
        %347 = vmatmul.mubr.f32.gmra.mrb[0].mxu0 %v274
        %v348 = vpop.f32.mrb[0].mxu0
        %v349 = vadd.f32 %v270, %v348
        %v350 = vpop.f32.mrb[0].mxu0
        %351 = vmatprep.mubr.f32.mxu0 0.0
        %352 = vmatmul.mubr.f32.gmra.mrb[0].mxu0 %v277
        %v353 = vpop.f32.mrb[0].mxu0
        %v354 = vadd.f32 %v270, %v353
        %v355 = vpop.f32.mrb[0].mxu0
        %356 = vmatprep.mubr.f32.mxu0 0.0
        %357 = vmatmul.mubr.f32.gmra.mrb[0].mxu0 %v280
        %v358 = vpop.f32.mrb[0].mxu0
        %v359 = vadd.f32 %v270, %v358
        %v360 = vpop.f32.mrb[0].mxu0
        %361 = vdwg.mxu0
        %362 = vadd.xlane.f32.xlu0 %v349
        %v363 = vpop.xlane.xlu0 %362
        %364 = vadd.xlane.f32.xlu0 %v354
        %v365 = vpop.xlane.xlu0 %364
        %366 = vadd.xlane.f32.xlu0 %v359
        %v367 = vpop.xlane.xlu0 %366
        %v368 = vrcp.pop 128.0
        %v369 = vmul.f32 %v363, %v368
        %v370 = vmul.f32 %v365, %v368
        %v371 = vmul.f32 %v367, %v368
        %v372 = vsub.f32 %v349, %v369
        %v373 = vsub.f32 %v354, %v370
        %v374 = vsub.f32 %v359, %v371
        %v375 = vmul.f32 %v372, %v372
        %v376 = vmul.f32 %v373, %v373
        %v377 = vmul.f32 %v374, %v374
        %378 = vadd.xlane.f32.xlu0 %v375
        %v379 = vpop.xlane.xlu0 %378
        %380 = vadd.xlane.f32.xlu0 %v376
        %v381 = vpop.xlane.xlu0 %380
        %382 = vadd.xlane.f32.xlu0 %v377
        %v383 = vpop.xlane.xlu0 %382
        %v384 = vmul.f32 %v379, %v368
        %v385 = vmul.f32 %v381, %v368
        %v386 = vmul.f32 %v383, %v368
        %v387 = vadd.f32 %v384, 1e-05
        %v388 = vadd.f32 %v385, 1e-05
        %v389 = vadd.f32 %v386, 1e-05
        %v390 = vrsqrt.pop %v387
        %v391 = vrsqrt.pop %v388
        %v392 = vrsqrt.pop %v389
        %v393 = vmul.f32 %v372, %v390
        %v394 = vmul.f32 %v373, %v391
        %v395 = vmul.f32 %v374, %v392
        %v396 = vld [vmem:[%s3] sm:$0x1]
        %v398 = vlaneseq
        %v399 = vshrl.u32 %v398, 7
        %v400 = vsub.s32 0, %v399
        %v401 = vrot.slane %v396, %v400
        %v403 = vmul.f32 %v393, %v401
        %v404 = vmul.f32 %v394, %v401
        %v405 = vmul.f32 %v395, %v401
        %v406 = vld [vmem:[%s4] sm:$0x1]
        %v408 = vlaneseq
        %v409 = vshrl.u32 %v408, 7
        %v410 = vsub.s32 0, %v409
        %v411 = vrot.slane %v406, %v410
        %v413 = vadd.f32 %v403, %v411
        %v414 = vadd.f32 %v404, %v411
        %v415 = vadd.f32 %v405, %v411
        %v416 = vmax.f32 %v413, 0.0
        %v417 = vmax.f32 %v414, 0.0
        %v418 = vmax.f32 %v415, 0.0
        %419 = vst [vmem:[%s242] sm:$0xff] %v416
        %420 = vst [vmem:[%s242 + $0x8] sm:$0xff] %v417
        %421 = vst [vmem:[%s242 + $0x10] sm:$0xff] %v418
        %s422 = sand.u32 %s153, 1
        %s423 = scalar_lea.sflag [#allocation3], %s422
        %s424 = sand.u32 %s153, 1
        %s425 = smul.addr %s424, 24
        %s426 = scalar_lea.vmem [#allocation2], %s425
        // Predicated region
        $region41: #{tpu_custom_call.1} parent=39 // pred_check
          %p427 = pneg %p163
        $region42: #{tpu_custom_call.1} parent=39 // pred_check_branch
          %429 = sbr.rel (%p427) target = $region44
        $region43: #{tpu_custom_call.1} parent=39 // pred_region
          %s430 = smul.u32 3, %s24
          %s432 = ssub.s32 384, 384
          %433 = vsyncadd %s423, %s432
          %s434 = smul.addr %s430, 2
          %s435 = sadd.s32 %s23, %s434
          %s436 = smul.addr %s435, 128
          %s437 = scalar_lea.hbm %s5, %s436
          %s438 = sshll.u32 %s426, 4
          %s439 = int_to_ptr.vmem [resolvable:$true] %s438
          %444 = dma.vmem_to_hbm [thread:$0]  %s439, 384, %s437, %s423, 128, 256, 8
        $region44: #{tpu_custom_call.1} parent=39 // pred_fallthru
          _
      $region40: #{tpu_custom_call.1} parent=5 // pred_fallthru
        _
      %p445 = scmp.le.s32.totalorder 2, %s14
      // Predicated region
      $region45: #{tpu_custom_call.1} parent=5 // pred_check
        %p446 = pneg %p445
      $region46: #{tpu_custom_call.1} parent=5 // pred_check_branch
        %448 = sbr.rel (%p446) target = $region48
      $region47: #{tpu_custom_call.1} parent=5 // pred_region
        %s449 = ssub.s32 %s14, 2
        // Predicated region
        $region49: #{tpu_custom_call.1} parent=47 // pred_check
          %p450 = pneg %p169
        $region50: #{tpu_custom_call.1} parent=47 // pred_check_branch
          %452 = sbr.rel (%p450) target = $region52
        $region51: #{tpu_custom_call.1} parent=47 // pred_region
          %s453 = sand.u32 %s154, 1
          %s454 = scalar_lea.sflag [#allocation3], %s453
          %s455 = sand.u32 %s154, 1
          %s456 = smul.addr %s455, 24
          %s457 = scalar_lea.vmem [#allocation2], %s456
          %458 = dma.done %s454, 384
        $region52: #{tpu_custom_call.1} parent=47 // pred_fallthru
          _
      $region48: #{tpu_custom_call.1} parent=5 // pred_fallthru
        _
    $region6: #{tpu_custom_call.1} parent=1 // loop_footer
      %s18 = sadd.s32 1, %s14
    $region7: #{tpu_custom_call.1} parent=1 // loop_footer_branch
      %13 = sbr.rel target = $region3
    $region8: #{tpu_custom_call.1} parent=1 // loop_exit
      _
    %459 = vsyncpa [#allocation3], 1
    %s460 = scalar_lea.sflag [#allocation3], 1
    %461 = vsyncpa %s460, 1

// kernel: tpu_custom_call.1
$region0: #{tpu_custom_call.1}
  #allocation0 [shape = 'u32[]', space=smem, size = 0x4, offset = 0x4, fixed_abs, tag = 'smem constant byte address 0x4 - core index']
  #allocation1 [shape = 'u32[144,128]{1,0:T(1,128)}', space=vmem, size = 0x12000, scoped, tag = 'internal scratch']
  %s0 = inlined_call_operand.vmem [shape: f32[2,20,64], index: 0, kind: input, shape index: {}]
  %s1 = inlined_call_operand.vmem [shape: f32[64,128], index: 1, kind: input, shape index: {}]
  %s2 = inlined_call_operand.vmem [shape: f32[1,128], index: 2, kind: input, shape index: {}]
  %s3 = inlined_call_operand.vmem [shape: f32[1,128], index: 3, kind: input, shape index: {}]
  %s4 = inlined_call_operand.vmem [shape: f32[1,128], index: 4, kind: input, shape index: {}]
  %s5 = inlined_call_operand.hbm [shape: f32[20,256], index: 5, kind: output, shape index: {}]
  %s6 = sld [smem:[#allocation0]]
  $region53: #{tpu_custom_call.1} parent=0
    _
  %s8 = ssub.s32 1, %s6
  %s9 = scalar_select 0, %s8, %s6
  $region1: #{tpu_custom_call.1} parent=0
    #allocation2 [shape = 'u8[24576]{0}', space=vmem, size = 0x6000, scoped, tag = 'output window, operand 0']
    #allocation3 [shape = 's32[2]{0}', space=sflag, size = 0x8, scoped, tag = 'scoped memory for tpu_custom_call.1']
    %10 = vsyncpa [#allocation3], 0
    %s11 = scalar_lea.sflag [#allocation3], 1
    %12 = vsyncpa %s11, 0
    loop: start=0, step=1, limit=4
    $region2: #{tpu_custom_call.1} parent=1 // loop_pre_header
      _
    $region3: #{tpu_custom_call.1} parent=1 // loop_header
      %s14 = sphi 0, %s18
      %p15 = scmp.ge.s32.totalorder %s14, 4
      %s21 = sphi 0, %s33
      %s22 = sphi 0, %s29
      %s23 = sphi 0, %s21
      %s24 = sphi 0, %s22
      %s25 = sphi 0, %s23
      %s26 = sphi 0, %s24
      %s38 = sphi 0, %s40
      %s41 = sphi 0, %s38
      %s42 = sphi 0, %s41
      %s58 = sphi 0, %s42
      %s62 = sphi 0, %s62
      %s64 = sphi 0, %s62
      %s65 = sphi 0, %s64
      %s79 = sphi 0, %s65
      %s83 = sphi 0, %s83
      %s85 = sphi 0, %s83
      %s86 = sphi 0, %s85
      %s100 = sphi 0, %s86
      %s104 = sphi 0, %s104
      %s106 = sphi 0, %s104
      %s107 = sphi 0, %s106
      %s121 = sphi 0, %s107
      %s125 = sphi 0, %s125
      %s127 = sphi 0, %s125
      %s128 = sphi 0, %s127
      %s142 = sphi 0, %s128
      %s150 = sphi 0, %s152
      %s153 = sphi 0, %s150
      %s154 = sphi 0, %s153
      %s170 = sphi 0, %s154
    $region4: #{tpu_custom_call.1} parent=1 // loop_header_branch
      %17 = sbr.rel (%p15) target = $region8
    $region5: #{tpu_custom_call.1} parent=1 // loop_body
      %s19 = ssub.s32 %s14, 1
      %s20 = ssub.s32 %s14, 2
      %s27 = sadd.s32 1, %s22
      %p28 = scmp.ge.s32.totalorder %s27, 1
      %s29 = scalar_select %p28, 0, %s27
      %s30 = sadd.s32 1, %s21
      %s31 = scalar_select %p28, %s30, %s21
      %p32 = scmp.ge.s32.totalorder %s31, 2
      %s33 = scalar_select %p32, 0, %s31
      %s34 = ssub.s32 %s21, %s33
      %s35 = ssub.s32 %s22, %s29
      %s36 = sor.u32 %s34, %s35
      %p37 = scmp.eq.s32.totalorder %s36, 0
      %s39 = sadd.s32 %s38, 1
      %s40 = scalar_select %p37, %s38, %s39
      %p43 = pneg %p37
      %p44 = scmp.eq.s32.totalorder %s14, 1
      %p45 = por %p43, %p44
      %p46 = scmp.ne.s32.totalorder %s38, %s41
      %p47 = scmp.eq.s32.totalorder %s14, 0
      %p48 = por %p46, %p47
      %p49 = scmp.ne.s32.totalorder %s38, %s41
      %p50 = scmp.eq.s32.totalorder %s19, 1
      %p51 = por %p49, %p50
      %p52 = scmp.ne.s32.totalorder %s41, %s42
      %p53 = scmp.eq.s32.totalorder %s19, 0
      %p54 = por %p52, %p53
      %p55 = scmp.ne.s32.totalorder %s41, %s42
      %p56 = scmp.eq.s32.totalorder %s20, 1
      %p57 = por %p55, %p56
      %p59 = scmp.ne.s32.totalorder %s42, %s58
      %p60 = scmp.eq.s32.totalorder %s20, 0
      %p61 = por %p59, %p60
      %s63 = sadd.s32 %s62, 1
      %p66 = scmp.eq.s32.totalorder %s14, 1
      %p67 = scmp.ne.s32.totalorder %s62, %s64
      %p68 = scmp.eq.s32.totalorder %s14, 0
      %p69 = por %p67, %p68
      %p70 = scmp.ne.s32.totalorder %s62, %s64
      %p71 = scmp.eq.s32.totalorder %s19, 1
      %p72 = por %p70, %p71
      %p73 = scmp.ne.s32.totalorder %s64, %s65
      %p74 = scmp.eq.s32.totalorder %s19, 0
      %p75 = por %p73, %p74
      %p76 = scmp.ne.s32.totalorder %s64, %s65
      %p77 = scmp.eq.s32.totalorder %s20, 1
      %p78 = por %p76, %p77
      %p80 = scmp.ne.s32.totalorder %s65, %s79
      %p81 = scmp.eq.s32.totalorder %s20, 0
      %p82 = por %p80, %p81
      %s84 = sadd.s32 %s83, 1
      %p87 = scmp.eq.s32.totalorder %s14, 1
      %p88 = scmp.ne.s32.totalorder %s83, %s85
      %p89 = scmp.eq.s32.totalorder %s14, 0
      %p90 = por %p88, %p89
      %p91 = scmp.ne.s32.totalorder %s83, %s85
      %p92 = scmp.eq.s32.totalorder %s19, 1
      %p93 = por %p91, %p92
      %p94 = scmp.ne.s32.totalorder %s85, %s86
      %p95 = scmp.eq.s32.totalorder %s19, 0
      %p96 = por %p94, %p95
      %p97 = scmp.ne.s32.totalorder %s85, %s86
      %p98 = scmp.eq.s32.totalorder %s20, 1
      %p99 = por %p97, %p98
      %p101 = scmp.ne.s32.totalorder %s86, %s100
      %p102 = scmp.eq.s32.totalorder %s20, 0
      %p103 = por %p101, %p102
      %s105 = sadd.s32 %s104, 1
      %p108 = scmp.eq.s32.totalorder %s14, 1
      %p109 = scmp.ne.s32.totalorder %s104, %s106
      %p110 = scmp.eq.s32.totalorder %s14, 0
      %p111 = por %p109, %p110
      %p112 = scmp.ne.s32.totalorder %s104, %s106
      %p113 = scmp.eq.s32.totalorder %s19, 1
      %p114 = por %p112, %p113
      %p115 = scmp.ne.s32.totalorder %s106, %s107
      %p116 = scmp.eq.s32.totalorder %s19, 0
      %p117 = por %p115, %p116
      %p118 = scmp.ne.s32.totalorder %s106, %s107
      %p119 = scmp.eq.s32.totalorder %s20, 1
      %p120 = por %p118, %p119
      %p122 = scmp.ne.s32.totalorder %s107, %s121
      %p123 = scmp.eq.s32.totalorder %s20, 0
      %p124 = por %p122, %p123
      %s126 = sadd.s32 %s125, 1
      %p129 = scmp.eq.s32.totalorder %s14, 1
      %p130 = scmp.ne.s32.totalorder %s125, %s127
      %p131 = scmp.eq.s32.totalorder %s14, 0
      %p132 = por %p130, %p131
      %p133 = scmp.ne.s32.totalorder %s125, %s127
      %p134 = scmp.eq.s32.totalorder %s19, 1
      %p135 = por %p133, %p134
      %p136 = scmp.ne.s32.totalorder %s127, %s128
      %p137 = scmp.eq.s32.totalorder %s19, 0
      %p138 = por %p136, %p137
      %p139 = scmp.ne.s32.totalorder %s127, %s128
      %p140 = scmp.eq.s32.totalorder %s20, 1
      %p141 = por %p139, %p140
      %p143 = scmp.ne.s32.totalorder %s128, %s142
      %p144 = scmp.eq.s32.totalorder %s20, 0
      %p145 = por %p143, %p144
      %s146 = ssub.s32 %s22, %s29
      %s147 = ssub.s32 %s21, %s33
      %s148 = sor.u32 %s146, %s147
      %p149 = scmp.eq.s32.totalorder %s148, 0
      %s151 = sadd.s32 %s150, 1
      %s152 = scalar_select %p149, %s150, %s151
      %p155 = pneg %p149
      %p156 = scmp.eq.s32.totalorder %s14, 1
      %p157 = por %p155, %p156
      %p158 = scmp.ne.s32.totalorder %s150, %s153
      %p159 = scmp.eq.s32.totalorder %s14, 0
      %p160 = por %p158, %p159
      %p161 = scmp.ne.s32.totalorder %s150, %s153
      %p162 = scmp.eq.s32.totalorder %s19, 1
      %p163 = por %p161, %p162
      %p164 = scmp.ne.s32.totalorder %s153, %s154
      %p165 = scmp.eq.s32.totalorder %s19, 0
      %p166 = por %p164, %p165
      %p167 = scmp.ne.s32.totalorder %s153, %s154
      %p168 = scmp.eq.s32.totalorder %s20, 1
      %p169 = por %p167, %p168
      %p171 = scmp.ne.s32.totalorder %s154, %s170
      %p172 = scmp.eq.s32.totalorder %s20, 0
      %p173 = por %p171, %p172
      %p174 = scmp.le.s32.totalorder 1, %s14
      %p175 = scmp.lt.s32.totalorder %s14, 3
      %p176 = pnand %p174, %p175
      %p177 = pneg %p176
      // Predicated region
      $region9: #{tpu_custom_call.1} parent=5 // pred_check
        _
      $region10: #{tpu_custom_call.1} parent=5 // pred_check_branch
        %179 = sbr.rel (%p176) target = $region12
      $region11: #{tpu_custom_call.1} parent=5 // pred_region
        %s180 = ssub.s32 %s14, 1
        // Predicated region
        $region13: #{tpu_custom_call.1} parent=11 // pred_check
          %p181 = pneg %p75
        $region14: #{tpu_custom_call.1} parent=11 // pred_check_branch
          %183 = sbr.rel (%p181) target = $region16
        $region15: #{tpu_custom_call.1} parent=11 // pred_region
          _
        $region16: #{tpu_custom_call.1} parent=11 // pred_fallthru
          _
        // Predicated region
        $region17: #{tpu_custom_call.1} parent=11 // pred_check
          %p184 = pneg %p96
        $region18: #{tpu_custom_call.1} parent=11 // pred_check_branch
          %186 = sbr.rel (%p184) target = $region20
        $region19: #{tpu_custom_call.1} parent=11 // pred_region
          _
        $region20: #{tpu_custom_call.1} parent=11 // pred_fallthru
          _
        // Predicated region
        $region21: #{tpu_custom_call.1} parent=11 // pred_check
          %p187 = pneg %p117
        $region22: #{tpu_custom_call.1} parent=11 // pred_check_branch
          %189 = sbr.rel (%p187) target = $region24
        $region23: #{tpu_custom_call.1} parent=11 // pred_region
          _
        $region24: #{tpu_custom_call.1} parent=11 // pred_fallthru
          _
        // Predicated region
        $region25: #{tpu_custom_call.1} parent=11 // pred_check
          %p190 = pneg %p138
        $region26: #{tpu_custom_call.1} parent=11 // pred_check_branch
          %192 = sbr.rel (%p190) target = $region28
        $region27: #{tpu_custom_call.1} parent=11 // pred_region
          _
        $region28: #{tpu_custom_call.1} parent=11 // pred_fallthru
          _
      $region12: #{tpu_custom_call.1} parent=5 // pred_fallthru
        _
      %p193 = scmp.lt.s32.totalorder %s14, 2
      // Predicated region
      $region29: #{tpu_custom_call.1} parent=5 // pred_check
        %p194 = pneg %p193
      $region30: #{tpu_custom_call.1} parent=5 // pred_check_branch
        %196 = sbr.rel (%p194) target = $region32
      $region31: #{tpu_custom_call.1} parent=5 // pred_region
        // Predicated region
        $region33: #{tpu_custom_call.1} parent=31 // pred_check
          %p197 = pneg %p48
        $region34: #{tpu_custom_call.1} parent=31 // pred_check_branch
          %199 = sbr.rel (%p197) target = $region36
        $region35: #{tpu_custom_call.1} parent=31 // pred_region
          %s200 = smul.u32 3, %s22
          %p201 = scmp.lt.s32.totalorder %s21, 1
          %s202 = scalar_select %p201, %s21, 1
          %p203 = scmp.lt.s32.totalorder %s200, 2
          %s204 = scalar_select %p203, %s200, 2
          %s205 = smul.addr %s202, 3
          %s206 = sadd.s32 %s204, %s205
          %s207 = smul.addr %s206, 8
          %s208 = scalar_lea.vmem %s0, %s207
          %s209 = smul.u32 3, %s22
        $region36: #{tpu_custom_call.1} parent=31 // pred_fallthru
          _
      $region32: #{tpu_custom_call.1} parent=5 // pred_fallthru
        _
      %p210 = scmp.le.s32.totalorder 1, %s14
      %p211 = scmp.lt.s32.totalorder %s14, 3
      %p212 = pnand %p210, %p211
      %p213 = pneg %p212
      // Predicated region
      $region37: #{tpu_custom_call.1} parent=5 // pred_check
        _
      $region38: #{tpu_custom_call.1} parent=5 // pred_check_branch
        %215 = sbr.rel (%p212) target = $region40
      $region39: #{tpu_custom_call.1} parent=5 // pred_region
        %s216 = ssub.s32 %s14, 1
        %s217 = smul.u32 3, %s24
        %p218 = scmp.lt.s32.totalorder %s23, 1
        %s219 = scalar_select %p218, %s23, 1
        %p220 = scmp.lt.s32.totalorder %s217, 2
        %s221 = scalar_select %p220, %s217, 2
        %s222 = smul.addr %s219, 3
        %s223 = sadd.s32 %s221, %s222
        %s224 = smul.addr %s223, 8
        %s225 = scalar_lea.vmem %s0, %s224
        %p226 = pneg %p54
        %p227 = pneg %p51
        %p228 = pneg %p75
        %p229 = pneg %p72
        %p230 = pneg %p96
        %p231 = pneg %p93
        %p232 = pneg %p117
        %p233 = pneg %p114
        %p234 = pneg %p138
        %p235 = pneg %p135
        %p236 = pneg %p166
        %p237 = pneg %p163
        %s238 = sand.u32 %s153, 1
        %s239 = scalar_lea.sflag [#allocation3], %s238
        %s240 = sand.u32 %s153, 1
        %s241 = smul.addr %s240, 24
        %s242 = scalar_lea.vmem [#allocation2], %s241
        %s243 = smul.u32 3, %s24
        %p244 = scmp.lt.s32.totalorder %s23, 1
        %s245 = scalar_select %p244, %s23, 1
        %p246 = scmp.lt.s32.totalorder %s243, 2
        %s247 = scalar_select %p246, %s243, 2
        %s248 = smul.addr %s245, 3
        %s249 = sadd.s32 %s247, %s248
        %s250 = smul.addr %s249, 8
        %s251 = scalar_lea.vmem %s0, %s250
        %s252 = smul.u32 3, %s24
        %s253 = smul.u32 3, %s24
        %v254 = vld [vmem:[%s251] sm:$0xff]
        %v255 = vld [vmem:[%s251 + $0x8] sm:$0xff]
        %v256 = vld [vmem:[%s251 + $0x10] sm:$0xff]
        %v257 = vld [vmem:[%s1] sm:$0xff]
        %v258 = vld [vmem:[%s1 + $0x8] sm:$0xff]
        %v259 = vld [vmem:[%s1 + $0x10] sm:$0xff]
        %v260 = vld [vmem:[%s1 + $0x18] sm:$0xff]
        %v261 = vld [vmem:[%s1 + $0x20] sm:$0xff]
        %v262 = vld [vmem:[%s1 + $0x28] sm:$0xff]
        %v263 = vld [vmem:[%s1 + $0x30] sm:$0xff]
        %v264 = vld [vmem:[%s1 + $0x38] sm:$0xff]
        %v265 = vld [vmem:[%s2] sm:$0x1]
        %v267 = vlaneseq
        %v268 = vshrl.u32 %v267, 7
        %v269 = vsub.s32 0, %v268
        %v270 = vrot.slane %v265, %v269
        %vm272 = vcmask 523264
        %v274 = vsel %vm272, %v254, 0
        %v277 = vsel %vm272, %v255, 0
        %v280 = vsel %vm272, %v256, 0
        %282 = vmatprep.subr.mxu0 0.0
        %283 = vmatpush1.msra.mxu0 %v257
        %284 = vmatprep.subr.mxu0 0.0
        %285 = vmatpush1.msra.mxu0 %v258
        %286 = vmatprep.subr.mxu0 0.0
        %287 = vmatpush1.msra.mxu0 %v259
        %288 = vmatprep.subr.mxu0 0.0
        %289 = vmatpush1.msra.mxu0 %v260
        %290 = vmatprep.subr.mxu0 0.0
        %291 = vmatpush1.msra.mxu0 %v261
        %292 = vmatprep.subr.mxu0 0.0
        %293 = vmatpush1.msra.mxu0 %v262
        %294 = vmatprep.subr.mxu0 0.0
        %295 = vmatpush1.msra.mxu0 %v263
        %296 = vmatprep.subr.mxu0 0.0
        %297 = vmatpush1.msra.mxu0 %v264
        %298 = vmatprep.subr.mxu0 0.0
        %299 = vmatpush1.msra.mxu0 0.0
        %300 = vmatprep.subr.mxu0 0.0
        %301 = vmatpush1.msra.mxu0 0.0
        %302 = vmatprep.subr.mxu0 0.0
        %303 = vmatpush1.msra.mxu0 0.0
        %304 = vmatprep.subr.mxu0 0.0
        %305 = vmatpush1.msra.mxu0 0.0
        %306 = vmatprep.subr.mxu0 0.0
        %307 = vmatpush1.msra.mxu0 0.0
        %308 = vmatprep.subr.mxu0 0.0
        %309 = vmatpush1.msra.mxu0 0.0
        %310 = vmatprep.subr.mxu0 0.0
        %311 = vmatpush1.msra.mxu0 0.0
        %312 = vmatprep.subr.mxu0 0.0
        %313 = vmatpush1.msra.mxu0 0.0
        %314 = vmatprep.subr.mxu0 0.0
        %315 = vmatpush1.msra.mxu0 0.0
        %316 = vmatprep.subr.mxu0 0.0
        %317 = vmatpush1.msra.mxu0 0.0
        %318 = vmatprep.subr.mxu0 0.0
        %319 = vmatpush1.msra.mxu0 0.0
        %320 = vmatprep.subr.mxu0 0.0
        %321 = vmatpush1.msra.mxu0 0.0
        %322 = vmatprep.subr.mxu0 0.0
        %323 = vmatpush1.msra.mxu0 0.0
        %324 = vmatprep.subr.mxu0 0.0
        %325 = vmatpush1.msra.mxu0 0.0
        %326 = vmatprep.subr.mxu0 0.0
        %327 = vmatpush1.msra.mxu0 0.0
        %328 = vmatprep.subr.mxu0 0.0
        %329 = vmatpush1.msra.mxu0 0.0
        %330 = vmatprep.subr.mxu0 0.0
        %331 = vmatpush1.msra.mxu0 0.0
        %332 = vmatprep.subr.mxu0 0.0
        %333 = vmatpush1.msra.mxu0 0.0
        %334 = vmatprep.subr.mxu0 0.0
        %335 = vmatpush1.msra.mxu0 0.0
        %336 = vmatprep.subr.mxu0 0.0
        %337 = vmatpush1.msra.mxu0 0.0
        %338 = vmatprep.subr.mxu0 0.0
        %339 = vmatpush1.msra.mxu0 0.0
        %340 = vmatprep.subr.mxu0 0.0
        %341 = vmatpush1.msra.mxu0 0.0
        %342 = vmatprep.subr.mxu0 0.0
        %343 = vmatpush1.msra.mxu0 0.0
        %344 = vmatprep.subr.mxu0 0.0
        %345 = vmatpush1.msra.mxu0 0.0
        %346 = vmatprep.mubr.f32.mxu0 0.0
        %347 = vmatmul.mubr.f32.gmra.mrb[0].mxu0 %v274
        %v348 = vpop.f32.mrb[0].mxu0
        %v349 = vadd.f32 %v270, %v348
        %v350 = vpop.f32.mrb[0].mxu0
        %351 = vmatprep.mubr.f32.mxu0 0.0
        %352 = vmatmul.mubr.f32.gmra.mrb[0].mxu0 %v277
        %v353 = vpop.f32.mrb[0].mxu0
        %v354 = vadd.f32 %v270, %v353
        %v355 = vpop.f32.mrb[0].mxu0
        %356 = vmatprep.mubr.f32.mxu0 0.0
        %357 = vmatmul.mubr.f32.gmra.mrb[0].mxu0 %v280
        %v358 = vpop.f32.mrb[0].mxu0
        %v359 = vadd.f32 %v270, %v358
        %v360 = vpop.f32.mrb[0].mxu0
        %361 = vdwg.mxu0
        %362 = vadd.xlane.f32.xlu0 %v349
        %v363 = vpop.xlane.xlu0 %362
        %364 = vadd.xlane.f32.xlu0 %v354
        %v365 = vpop.xlane.xlu0 %364
        %366 = vadd.xlane.f32.xlu0 %v359
        %v367 = vpop.xlane.xlu0 %366
        %v368 = vrcp.pop 128.0
        %v369 = vmul.f32 %v363, %v368
        %v370 = vmul.f32 %v365, %v368
        %v371 = vmul.f32 %v367, %v368
        %v372 = vsub.f32 %v349, %v369
        %v373 = vsub.f32 %v354, %v370
        %v374 = vsub.f32 %v359, %v371
        %v375 = vmul.f32 %v372, %v372
        %v376 = vmul.f32 %v373, %v373
        %v377 = vmul.f32 %v374, %v374
        %378 = vadd.xlane.f32.xlu0 %v375
        %v379 = vpop.xlane.xlu0 %378
        %380 = vadd.xlane.f32.xlu0 %v376
        %v381 = vpop.xlane.xlu0 %380
        %382 = vadd.xlane.f32.xlu0 %v377
        %v383 = vpop.xlane.xlu0 %382
        %v384 = vmul.f32 %v379, %v368
        %v385 = vmul.f32 %v381, %v368
        %v386 = vmul.f32 %v383, %v368
        %v387 = vadd.f32 %v384, 1e-05
        %v388 = vadd.f32 %v385, 1e-05
        %v389 = vadd.f32 %v386, 1e-05
        %v390 = vrsqrt.pop %v387
        %v391 = vrsqrt.pop %v388
        %v392 = vrsqrt.pop %v389
        %v393 = vmul.f32 %v372, %v390
        %v394 = vmul.f32 %v373, %v391
        %v395 = vmul.f32 %v374, %v392
        %v396 = vld [vmem:[%s3] sm:$0x1]
        %v398 = vlaneseq
        %v399 = vshrl.u32 %v398, 7
        %v400 = vsub.s32 0, %v399
        %v401 = vrot.slane %v396, %v400
        %v403 = vmul.f32 %v393, %v401
        %v404 = vmul.f32 %v394, %v401
        %v405 = vmul.f32 %v395, %v401
        %v406 = vld [vmem:[%s4] sm:$0x1]
        %v408 = vlaneseq
        %v409 = vshrl.u32 %v408, 7
        %v410 = vsub.s32 0, %v409
        %v411 = vrot.slane %v406, %v410
        %v413 = vadd.f32 %v403, %v411
        %v414 = vadd.f32 %v404, %v411
        %v415 = vadd.f32 %v405, %v411
        %v416 = vmax.f32 %v413, 0.0
        %v417 = vmax.f32 %v414, 0.0
        %v418 = vmax.f32 %v415, 0.0
        %419 = vst [vmem:[%s242] sm:$0xff] %v416
        %420 = vst [vmem:[%s242 + $0x8] sm:$0xff] %v417
        %421 = vst [vmem:[%s242 + $0x10] sm:$0xff] %v418
        %s422 = sand.u32 %s153, 1
        %s423 = scalar_lea.sflag [#allocation3], %s422
        %s424 = sand.u32 %s153, 1
        %s425 = smul.addr %s424, 24
        %s426 = scalar_lea.vmem [#allocation2], %s425
        // Predicated region
        $region41: #{tpu_custom_call.1} parent=39 // pred_check
          %p427 = pneg %p163
        $region42: #{tpu_custom_call.1} parent=39 // pred_check_branch
          %429 = sbr.rel (%p427) target = $region44
        $region43: #{tpu_custom_call.1} parent=39 // pred_region
          %s430 = smul.u32 3, %s24
          %s432 = ssub.s32 384, 384
          %433 = vsyncadd %s423, %s432
          %s434 = smul.addr %s430, 2
          %s435 = sadd.s32 %s23, %s434
          %s436 = smul.addr %s435, 128
          %s437 = scalar_lea.hbm %s5, %s436
          %s438 = sshll.u32 %s426, 4
          %s439 = int_to_ptr.vmem [resolvable:$true] %s438
          %444 = dma.vmem_to_hbm [thread:$0]  %s439, 384, %s437, %s423, 128, 256, 8
        $region44: #{tpu_custom_call.1} parent=39 // pred_fallthru
          _
      $region40: #{tpu_custom_call.1} parent=5 // pred_fallthru
        _
      %p445 = scmp.le.s32.totalorder 2, %s14
      // Predicated region
      $region45: #{tpu_custom_call.1} parent=5 // pred_check
        %p446 = pneg %p445
      $region46: #{tpu_custom_call.1} parent=5 // pred_check_branch
        %448 = sbr.rel (%p446) target = $region48
      $region47: #{tpu_custom_call.1} parent=5 // pred_region
        %s449 = ssub.s32 %s14, 2
        // Predicated region
        $region49: #{tpu_custom_call.1} parent=47 // pred_check
          %p450 = pneg %p169
        $region50: #{tpu_custom_call.1} parent=47 // pred_check_branch
          %452 = sbr.rel (%p450) target = $region52
        $region51: #{tpu_custom_call.1} parent=47 // pred_region
          %s453 = sand.u32 %s154, 1
          %s454 = scalar_lea.sflag [#allocation3], %s453
          %s455 = sand.u32 %s154, 1
          %s456 = smul.addr %s455, 24
          %s457 = scalar_lea.vmem [#allocation2], %s456
          %458 = dma.done %s454, 384
        $region52: #{tpu_custom_call.1} parent=47 // pred_fallthru
          _
      $region48: #{tpu_custom_call.1} parent=5 // pred_fallthru
        _
    $region6: #{tpu_custom_call.1} parent=1 // loop_footer
      %s18 = sadd.s32 1, %s14
    $region7: #{tpu_custom_call.1} parent=1 // loop_footer_branch
      %13 = sbr.rel target = $region3
    $region8: #{tpu_custom_call.1} parent=1 // loop_exit
      _
    %459 = vsyncpa [#allocation3], 1
    %s460 = scalar_lea.sflag [#allocation3], 1
    %461 = vsyncpa %s460, 1

</llo_original>
